<compile_context>
chip_gen: v7x
topology: tpu7x:2x2x1
jax: 0.10.0
libtpu: 0.0.40
codegen_flags: <defaults>
</compile_context>

<pallas_src>
import functools

import jax
import jax.numpy as jnp
from jax.experimental import pallas as pl
from jax.experimental.pallas import tpu as pltpu


def _round_up(x, m):
    return (x + m - 1) // m * m


# ---------------------------------------------------------------------------
# Kernel 1: fused matmul + per-channel affine (folded BN) + residual + ReLU
# ---------------------------------------------------------------------------
def _matmul_affine_kernel(x_ref, w_ref, s_ref, b_ref, *rest, relu, has_res):
    if has_res:
        r_ref, o_ref = rest
    else:
        (o_ref,) = rest
    acc = jnp.dot(x_ref[...], w_ref[...], preferred_element_type=jnp.float32)
    acc = acc * s_ref[...] + b_ref[...]
    if has_res:
        acc = acc + r_ref[...].astype(jnp.float32)
    if relu:
        acc = jnp.maximum(acc, 0.0)
    o_ref[...] = acc.astype(o_ref.dtype)


@functools.partial(jax.jit, static_argnames=("relu",))
def matmul_affine(x, w, scale, bias, residual=None, *, relu=False):
    """out[:M,:N] = act((x @ w) * scale + bias (+ residual))."""
    M, K = x.shape
    _, N = w.shape
    Mp = _round_up(M, 8)
    Kp = _round_up(K, 8)
    Np = _round_up(N, 128)
    tn = 256 if Np % 256 == 0 else 128

    xp = jnp.pad(x, ((0, Mp - M), (0, Kp - K)))
    wp = jnp.pad(w, ((0, Kp - K), (0, Np - N)))
    sp = jnp.pad(scale, (0, Np - N)).reshape(1, Np)
    bp = jnp.pad(bias, (0, Np - N)).reshape(1, Np)

    has_res = residual is not None
    args = [xp, wp, sp, bp]
    in_specs = [
        pl.BlockSpec((Mp, Kp), lambda j: (0, 0)),
        pl.BlockSpec((Kp, tn), lambda j: (0, j)),
        pl.BlockSpec((1, tn), lambda j: (0, j)),
        pl.BlockSpec((1, tn), lambda j: (0, j)),
    ]
    if has_res:
        rp = jnp.pad(residual, ((0, Mp - M), (0, Np - N)))
        args.append(rp)
        in_specs.append(pl.BlockSpec((Mp, tn), lambda j: (0, j)))

    kernel = functools.partial(_matmul_affine_kernel, relu=relu, has_res=has_res)
    out = pl.pallas_call(
        kernel,
        out_shape=jax.ShapeDtypeStruct((Mp, Np), x.dtype),
        grid=(Np // tn,),
        in_specs=in_specs,
        out_specs=pl.BlockSpec((Mp, tn), lambda j: (0, j)),
        compiler_params=pltpu.CompilerParams(dimension_semantics=("parallel",)),
    )(*args)
    return out[:M, :N]


# ---------------------------------------------------------------------------
# Kernel 2: depthwise 3x3 conv (dilation 1/2) with fused input-ReLU
# ---------------------------------------------------------------------------
def _depthwise3x3_kernel(x_ref, w_ref, o_ref, *, dilation, relu_in):
    _, Ho, Wo, C = o_ref.shape
    acc = None
    for ky in range(3):
        for kx in range(3):
            patch = x_ref[:, ky * dilation:ky * dilation + Ho,
                          kx * dilation:kx * dilation + Wo, :].astype(jnp.float32)
            if relu_in:
                patch = jnp.maximum(patch, 0.0)
            wk = w_ref[ky, kx].astype(jnp.float32).reshape(1, 1, 1, C)
            term = patch * wk
            acc = term if acc is None else acc + term
    o_ref[...] = acc.astype(o_ref.dtype)


@functools.partial(jax.jit, static_argnames=("dilation", "relu_in"))
def depthwise3x3(xpadded, w, *, dilation, relu_in):
    """Stride-1 dilated 3x3 depthwise conv on a pre-padded NHWC tensor."""
    N, Hp, Wp, C = xpadded.shape
    Ho = Hp - 2 * dilation
    Wo = Wp - 2 * dilation
    kernel = functools.partial(_depthwise3x3_kernel, dilation=dilation, relu_in=relu_in)
    return pl.pallas_call(
        kernel,
        out_shape=jax.ShapeDtypeStruct((N, Ho, Wo, C), xpadded.dtype),
        grid=(N,),
        in_specs=[
            pl.BlockSpec((1, Hp, Wp, C), lambda n: (n, 0, 0, 0)),
            pl.BlockSpec((3, 3, C), lambda n: (0, 0, 0)),
        ],
        out_specs=pl.BlockSpec((1, Ho, Wo, C), lambda n: (n, 0, 0, 0)),
        compiler_params=pltpu.CompilerParams(dimension_semantics=("parallel",)),
    )(xpadded, w)


# ---------------------------------------------------------------------------
# Layer wrappers (layout plumbing only; compute lives in the kernels above)
# ---------------------------------------------------------------------------
def _fixed_pad(x, dilation):
    # fixed_padding(kernel_size=3, rate=dilation) -> symmetric pad of `dilation`
    d = dilation
    return jnp.pad(x, ((0, 0), (d, d), (d, d), (0, 0)))


def sep_conv_bn(x, p, *, stride, dilation, relu_in, relu_out=False, residual=None):
    """SeparableConv2d + folded BatchNorm (+ fused residual / ReLUs). NHWC."""
    xp = _fixed_pad(x, dilation)
    y = depthwise3x3(xp, p["dw"], dilation=dilation, relu_in=relu_in)
    if stride == 2:
        y = y[:, ::2, ::2, :]
    n, ho, wo, ci = y.shape
    y2 = y.reshape(n * ho * wo, ci)
    res2 = None if residual is None else residual.reshape(n * ho * wo, residual.shape[-1])
    out2 = matmul_affine(y2, p["pw"], p["scale"], p["bias"], res2, relu=relu_out)
    return out2.reshape(n, ho, wo, -1)


def conv3x3_bn_relu(x, p, *, stride):
    """Full 3x3 conv (padding=1) + BN + ReLU via im2col + fused matmul kernel."""
    n, h, w, c = x.shape
    xp = jnp.pad(x, ((0, 0), (1, 1), (1, 1), (0, 0)))
    ho = (h + 2 - 3) // stride + 1
    wo = (w + 2 - 3) // stride + 1
    cols = []
    for ky in range(3):
        for kx in range(3):
            cols.append(xp[:, ky:ky + (ho - 1) * stride + 1:stride,
                           kx:kx + (wo - 1) * stride + 1:stride, :])
    patches = jnp.concatenate(cols, axis=-1).reshape(n * ho * wo, 9 * c)
    out = matmul_affine(patches, p["w"], p["scale"], p["bias"], relu=True)
    return out.reshape(n, ho, wo, -1)


def skip_conv_bn(x, p, *, stride):
    """1x1 conv (stride 1/2) + folded BN for the Block skip path."""
    if stride == 2:
        x = x[:, ::2, ::2, :]
    n, h, w, c = x.shape
    out = matmul_affine(x.reshape(n * h * w, c), p["w"], p["scale"], p["bias"], relu=False)
    return out.reshape(n, h, w, -1)


def block_forward(x, bp):
    if bp["skip"] is not None:
        skip = skip_conv_bn(x, bp["skip"], stride=bp["skip_stride"])
    else:
        skip = x
    h = x
    n = len(bp["seps"])
    for i, sp in enumerate(bp["seps"]):
        last = i == n - 1
        h = sep_conv_bn(
            h, sp,
            stride=sp["stride"], dilation=sp["dilation"], relu_in=sp["relu_in"],
            relu_out=(bp["relu_after"] if last else False),
            residual=(skip if last else None),
        )
    return h


# ---------------------------------------------------------------------------
# Parameters (random He-style init; BN folded to eval-mode per-channel affine)
# ---------------------------------------------------------------------------
_BN_EPS = 1e-5


def _make_bn_affine(key, c):
    kg, kb = jax.random.split(key)
    gamma = jax.random.uniform(kg, (c,), jnp.float32, 0.8, 1.2)
    beta = jax.random.normal(kb, (c,), jnp.float32) * 0.05
    scale = gamma / jnp.sqrt(1.0 + _BN_EPS)     # running_var=1, running_mean=0
    bias = beta
    return scale, bias


def make_conv3x3_params(key, cin, cout):
    kw, kb = jax.random.split(key)
    w = jax.random.normal(kw, (9 * cin, cout), jnp.float32) * (1.0 / (9 * cin)) ** 0.5
    scale, bias = _make_bn_affine(kb, cout)
    return {"w": w, "scale": scale, "bias": bias}


def make_conv1x1_bn_params(key, cin, cout):
    kw, kb = jax.random.split(key)
    w = jax.random.normal(kw, (cin, cout), jnp.float32) * (1.0 / cin) ** 0.5
    scale, bias = _make_bn_affine(kb, cout)
    return {"w": w, "scale": scale, "bias": bias}


def make_sep_params(key, cin, cout):
    kd, kp, kb = jax.random.split(key, 3)
    dw = jax.random.normal(kd, (3, 3, cin), jnp.float32) * (1.0 / 9.0) ** 0.5
    pw = jax.random.normal(kp, (cin, cout), jnp.float32) * (1.0 / cin) ** 0.5
    scale, bias = _make_bn_affine(kb, cout)
    return {"dw": dw, "pw": pw, "scale": scale, "bias": bias}


def make_block_params(key, inplanes, planes, reps, stride, dilation,
                      start_with_relu, grow_first, is_last, relu_after):
    spec = []
    filters = inplanes
    if grow_first:
        spec.append((inplanes, planes, 1, dilation))
        filters = planes
    for _ in range(reps - 1):
        spec.append((filters, filters, 1, dilation))
    if not grow_first:
        spec.append((inplanes, planes, 1, dilation))
    if stride != 1:
        spec.append((planes, planes, 2, 1))
    if stride == 1 and is_last:
        spec.append((planes, planes, 1, 1))

    keys = jax.random.split(key, len(spec) + 1)
    seps = []
    for idx, (cin, cout, s, d) in enumerate(spec):
        p = make_sep_params(keys[idx], cin, cout)
        p["stride"] = s
        p["dilation"] = d
        p["relu_in"] = bool(start_with_relu or idx > 0)
        seps.append(p)

    skip = None
    if planes != inplanes or stride != 1:
        skip = make_conv1x1_bn_params(keys[-1], inplanes, planes)

    return {"seps": seps, "skip": skip, "skip_stride": stride, "relu_after": relu_after}


def build_params(key):
    # output_stride = 16: entry_block3_stride=2, middle dilation=1, exit dilations=(1, 2)
    keys = jax.random.split(key, 32)
    ki = iter(keys)
    params = {}
    params["conv1"] = make_conv3x3_params(next(ki), 3, 32)
    params["conv2"] = make_conv3x3_params(next(ki), 32, 64)
    params["block1"] = make_block_params(next(ki), 64, 128, reps=2, stride=2, dilation=1,
                                         start_with_relu=False, grow_first=True,
                                         is_last=False, relu_after=True)
    params["block2"] = make_block_params(next(ki), 128, 256, reps=2, stride=2, dilation=1,
                                         start_with_relu=False, grow_first=True,
                                         is_last=False, relu_after=False)
    params["block3"] = make_block_params(next(ki), 256, 728, reps=2, stride=2, dilation=1,
                                         start_with_relu=True, grow_first=True,
                                         is_last=True, relu_after=False)
    for i in range(4, 20):
        params[f"block{i}"] = make_block_params(next(ki), 728, 728, reps=3, stride=1,
                                                dilation=1, start_with_relu=True,
                                                grow_first=True, is_last=False,
                                                relu_after=False)
    params["block20"] = make_block_params(next(ki), 728, 1024, reps=2, stride=1, dilation=1,
                                          start_with_relu=True, grow_first=False,
                                          is_last=True, relu_after=True)
    params["conv3"] = make_sep_params(next(ki), 1024, 1536)
    params["conv4"] = make_sep_params(next(ki), 1536, 1536)
    params["conv5"] = make_sep_params(next(ki), 1536, 2048)
    return params


# ---------------------------------------------------------------------------
# Full ModifiedAlignedXception forward
# ---------------------------------------------------------------------------
def xception_forward(params, x_nchw):
    x = jnp.transpose(x_nchw, (0, 2, 3, 1)).astype(jnp.float32)     # NHWC

    x = conv3x3_bn_relu(x, params["conv1"], stride=2)               # conv1 + bn1 + relu
    x = conv3x3_bn_relu(x, params["conv2"], stride=1)               # conv2 + bn2 + relu

    x = block_forward(x, params["block1"])                          # block1 + relu
    low_level = x
    x = block_forward(x, params["block2"])
    x = block_forward(x, params["block3"])
    for i in range(4, 20):
        x = block_forward(x, params[f"block{i}"])
    x = block_forward(x, params["block20"])                         # block20 + relu

    # exit flow: sep conv + bn + relu (dilation 2), x3
    x = sep_conv_bn(x, params["conv3"], stride=1, dilation=2, relu_in=False, relu_out=True)
    x = sep_conv_bn(x, params["conv4"], stride=1, dilation=2, relu_in=False, relu_out=True)
    x = sep_conv_bn(x, params["conv5"], stride=1, dilation=2, relu_in=False, relu_out=True)

    out = jnp.transpose(x, (0, 3, 1, 2))                            # back to NCHW
    low = jnp.transpose(low_level, (0, 3, 1, 2))
    return out, low


if __name__ == "__main__":
    root = jax.random.PRNGKey(0)
    kk = jax.random.split(root, 12)

    # --- unit check: fused matmul / affine / residual / relu kernel --------
    M, K, N = 44, 27, 96
    xs = jax.random.randint(kk[0], (M, K), -1, 2).astype(jnp.float32)
    ws = jax.random.randint(kk[1], (K, N), -1, 2).astype(jnp.float32)
    sc = jax.random.uniform(kk[2], (N,), jnp.float32, 0.5, 1.5)
    bi = jax.random.normal(kk[3], (N,), jnp.float32) * 0.1
    rs = jax.random.normal(kk[4], (M, N), jnp.float32)
    got = matmul_affine(xs, ws, sc, bi, rs, relu=True)
    want = jnp.maximum((xs @ ws) * sc + bi + rs, 0.0)
    assert got.shape == want.shape
    assert bool(jnp.allclose(got, want, atol=1e-4, rtol=1e-4)), "matmul_affine mismatch"

    got2 = matmul_affine(xs, ws, sc, bi, relu=False)
    want2 = (xs @ ws) * sc + bi
    assert bool(jnp.allclose(got2, want2, atol=1e-4, rtol=1e-4)), "matmul_affine (no res) mismatch"

    # --- unit check: depthwise 3x3 kernel (dilation 1 and 2) ---------------
    for dil, hw in ((1, 12), (2, 8)):
        xd = jax.random.normal(kk[5], (2, hw, hw, 128), jnp.float32)
        wd = jax.random.normal(kk[6], (3, 3, 128), jnp.float32)
        xdp = _fixed_pad(xd, dil)
        gdw = depthwise3x3(xdp, wd, dilation=dil, relu_in=True)
        ref = None
        for ky in range(3):
            for kx in range(3):
                p_ = jnp.maximum(xdp[:, ky * dil:ky * dil + hw, kx * dil:kx * dil + hw, :], 0.0)
                t_ = p_ * wd[ky, kx]
                ref = t_ if ref is None else ref + t_
        assert bool(jnp.allclose(gdw, ref, atol=1e-4, rtol=1e-4)), f"depthwise mismatch d={dil}"

    # --- full ModifiedAlignedXception forward (output_stride=16) -----------
    params = build_params(kk[7])
    x_in = jax.random.normal(kk[8], (2, 3, 64, 64), jnp.float32)
    out, low = xception_forward(params, x_in)
    out = jax.block_until_ready(out)
    low = jax.block_until_ready(low)

    assert out.shape == (2, 2048, 4, 4), out.shape
    assert low.shape == (2, 128, 16, 16), low.shape
    assert bool(jnp.all(jnp.isfinite(out))), "non-finite values in deep features"
    assert bool(jnp.all(jnp.isfinite(low))), "non-finite values in low-level features"

    print("KERNEL_OK")
</pallas_src>

<mosaic_0001>
module attributes {stable_mosaic.version = 11 : i64} {
  func.func @_matmul_affine_kernel(%arg0: i32, %arg1: memref<48x32xf32, #tpu.memory_space<vmem>>, %arg2: memref<32x128xf32, #tpu.memory_space<vmem>>, %arg3: memref<1x128xf32, #tpu.memory_space<vmem>>, %arg4: memref<1x128xf32, #tpu.memory_space<vmem>>, %arg5: memref<48x128xf32, #tpu.memory_space<vmem>>, %arg6: memref<48x128xf32, #tpu.memory_space<vmem>>) attributes {dimension_semantics = [#tpu.dimension_semantics<parallel>], iteration_bounds = array<i64: 1>, scalar_prefetch = 0 : i64, scratch_operands = 0 : i64, tpu.core_type = #tpu.core_type<tc>, window_params = [{pipeline_mode = #tpu.pipeline_mode<synchronous>, transform_indices = @transform_0, window_bounds = array<i64: 48, 32>}, {transform_indices = @transform_1, window_bounds = array<i64: 32, 128>}, {transform_indices = @transform_2, window_bounds = array<i64: 1, 128>}, {transform_indices = @transform_3, window_bounds = array<i64: 1, 128>}, {transform_indices = @transform_4, window_bounds = array<i64: 48, 128>}, {transform_indices = @transform_5, window_bounds = array<i64: 48, 128>}]} {
    %c0 = arith.constant 0 : index
    %c0_0 = arith.constant 0 : index
    %0 = vector.load %arg1[%c0, %c0_0] : memref<48x32xf32, #tpu.memory_space<vmem>>, vector<48x32xf32>
    %c0_1 = arith.constant 0 : index
    %c0_2 = arith.constant 0 : index
    %1 = vector.load %arg2[%c0_1, %c0_2] : memref<32x128xf32, #tpu.memory_space<vmem>>, vector<32x128xf32>
    %cst = arith.constant dense<0.000000e+00> : vector<48x128xf32>
    %2 = tpu.matmul %0, %1, %cst {dimension_numbers = #tpu.dot_dimension_numbers<[1], [0], [0], [1], [0, 0, 1, 1], [], []>} : vector<48x32xf32>, vector<32x128xf32>, vector<48x128xf32> -> vector<48x128xf32>
    %c0_3 = arith.constant 0 : index
    %c0_4 = arith.constant 0 : index
    %3 = vector.load %arg3[%c0_3, %c0_4] : memref<1x128xf32, #tpu.memory_space<vmem>>, vector<1x128xf32>
    %4 = vector.broadcast %3 : vector<1x128xf32> to vector<48x128xf32>
    %5 = arith.mulf %2, %4 : vector<48x128xf32>
    %c0_5 = arith.constant 0 : index
    %c0_6 = arith.constant 0 : index
    %6 = vector.load %arg4[%c0_5, %c0_6] : memref<1x128xf32, #tpu.memory_space<vmem>>, vector<1x128xf32>
    %7 = vector.broadcast %6 : vector<1x128xf32> to vector<48x128xf32>
    %8 = arith.addf %5, %7 : vector<48x128xf32>
    %c0_7 = arith.constant 0 : index
    %c0_8 = arith.constant 0 : index
    %9 = vector.load %arg5[%c0_7, %c0_8] : memref<48x128xf32, #tpu.memory_space<vmem>>, vector<48x128xf32>
    %10 = arith.addf %8, %9 : vector<48x128xf32>
    %cst_9 = arith.constant 0.000000e+00 : f32
    %11 = vector.broadcast %cst_9 : f32 to vector<48x128xf32>
    %12 = arith.maximumf %10, %11 : vector<48x128xf32>
    %c0_10 = arith.constant 0 : index
    %c0_11 = arith.constant 0 : index
    %13 = vector.load %arg6[%c0_10, %c0_11] : memref<48x128xf32, #tpu.memory_space<vmem>>, vector<48x128xf32>
    tpu.vector_store %arg6[%c0_10, %c0_11], %12 {strides = array<i32>} : memref<48x128xf32, #tpu.memory_space<vmem>>, vector<48x128xf32>,
    return
  }
  func.func @transform_0(%arg0: i32) -> (i32, i32) {
    %c0_i32 = arith.constant 0 : i32
    %c0_i32_0 = arith.constant 0 : i32
    %c0_i32_1 = arith.constant 0 : i32
    return %c0_i32, %c0_i32_0 : i32, i32
  }
  func.func @transform_1(%arg0: i32) -> (i32, i32) {
    %c0_i32 = arith.constant 0 : i32
    %c0_i32_0 = arith.constant 0 : i32
    return %c0_i32, %arg0 : i32, i32
  }
  func.func @transform_2(%arg0: i32) -> (i32, i32) {
    %c0_i32 = arith.constant 0 : i32
    %c0_i32_0 = arith.constant 0 : i32
    return %c0_i32, %arg0 : i32, i32
  }
  func.func @transform_3(%arg0: i32) -> (i32, i32) {
    %c0_i32 = arith.constant 0 : i32
    %c0_i32_0 = arith.constant 0 : i32
    return %c0_i32, %arg0 : i32, i32
  }
  func.func @transform_4(%arg0: i32) -> (i32, i32) {
    %c0_i32 = arith.constant 0 : i32
    %c0_i32_0 = arith.constant 0 : i32
    return %c0_i32, %arg0 : i32, i32
  }
  func.func @transform_5(%arg0: i32) -> (i32, i32) {
    %c0_i32 = arith.constant 0 : i32
    %c0_i32_0 = arith.constant 0 : i32
    return %c0_i32, %arg0 : i32, i32
  }
}

</mosaic_0001>

<llo_original>
// kernel: matmul_affine.1
$region0: #{matmul_affine.1}
  #allocation0 [shape = 'u32[]', space=smem, size = 0x4, offset = 0x4, fixed_abs, tag = 'smem constant byte address 0x4 - core index']
  #allocation1 [shape = 'u32[144,128]{1,0:T(1,128)}', space=vmem, size = 0x12000, scoped, tag = 'internal scratch']
  %s0 = inlined_call_operand.vmem [shape: f32[48,32], index: 0, kind: input, shape index: {}]
  %s1 = inlined_call_operand.vmem [shape: f32[32,128], index: 1, kind: input, shape index: {}]
  %s2 = inlined_call_operand.vmem [shape: f32[1,128], index: 2, kind: input, shape index: {}]
  %s3 = inlined_call_operand.vmem [shape: f32[1,128], index: 3, kind: input, shape index: {}]
  %s4 = inlined_call_operand.vmem [shape: f32[48,128], index: 4, kind: input, shape index: {}]
  %s5 = inlined_call_operand.hbm [shape: f32[48,128], index: 5, kind: output, shape index: {}]
  %s6 = sld [smem:[#allocation0]]
  $region30: #{matmul_affine.1} parent=0
    _
  %s8 = ssub.s32 1, %s6
  %s9 = scalar_select 0, %s8, %s6
  $region1: #{matmul_affine.1} parent=0
    #allocation2 [shape = 'u8[24576]{0}', space=vmem, size = 0x6000, scoped, tag = 'output window, operand 0, single buffered']
    #allocation3 [shape = 's32[1]{0}', space=sflag, size = 0x4, scoped, tag = 'scoped memory for matmul_affine.1']
    %10 = vsyncpa [#allocation3], 0
    // Predicated region
    $region2: #{matmul_affine.1} parent=1 // pred_check
      _
    $region3: #{matmul_affine.1} parent=1 // pred_check_branch
      %12 = sbr.rel (0) target = $region5
    $region4: #{matmul_affine.1} parent=1 // pred_region
      _
    $region5: #{matmul_affine.1} parent=1 // pred_fallthru
      _
    // Predicated region
    $region6: #{matmul_affine.1} parent=1 // pred_check
      _
    $region7: #{matmul_affine.1} parent=1 // pred_check_branch
      %14 = sbr.rel (0) target = $region9
    $region8: #{matmul_affine.1} parent=1 // pred_region
      _
    $region9: #{matmul_affine.1} parent=1 // pred_fallthru
      _
    // Predicated region
    $region10: #{matmul_affine.1} parent=1 // pred_check
      _
    $region11: #{matmul_affine.1} parent=1 // pred_check_branch
      %16 = sbr.rel (0) target = $region13
    $region12: #{matmul_affine.1} parent=1 // pred_region
      _
    $region13: #{matmul_affine.1} parent=1 // pred_fallthru
      _
    // Predicated region
    $region14: #{matmul_affine.1} parent=1 // pred_check
      _
    $region15: #{matmul_affine.1} parent=1 // pred_check_branch
      %18 = sbr.rel (0) target = $region17
    $region16: #{matmul_affine.1} parent=1 // pred_region
      _
    $region17: #{matmul_affine.1} parent=1 // pred_fallthru
      _
    // Predicated region
    $region18: #{matmul_affine.1} parent=1 // pred_check
      _
    $region19: #{matmul_affine.1} parent=1 // pred_check_branch
      %20 = sbr.rel (0) target = $region21
    $region20: #{matmul_affine.1} parent=1 // pred_region
      _
    $region21: #{matmul_affine.1} parent=1 // pred_fallthru
      _
    %v21 = vld [vmem:[%s0] sm:$0xff]
    %v22 = vld [vmem:[%s0 + $0x8] sm:$0xff]
    %v23 = vld [vmem:[%s0 + $0x10] sm:$0xff]
    %v24 = vld [vmem:[%s0 + $0x18] sm:$0xff]
    %v25 = vld [vmem:[%s0 + $0x20] sm:$0xff]
    %v26 = vld [vmem:[%s0 + $0x28] sm:$0xff]
    %v27 = vld [vmem:[%s1] sm:$0xff]
    %v28 = vld [vmem:[%s1 + $0x8] sm:$0xff]
    %v29 = vld [vmem:[%s1 + $0x10] sm:$0xff]
    %v30 = vld [vmem:[%s1 + $0x18] sm:$0xff]
    %vm31 = vcmask 261120
    %v33 = vsel %vm31, %v21, 0
    %v36 = vsel %vm31, %v22, 0
    %v39 = vsel %vm31, %v23, 0
    %v42 = vsel %vm31, %v24, 0
    %v45 = vsel %vm31, %v25, 0
    %v48 = vsel %vm31, %v26, 0
    %50 = vmatprep.subr.mxu0 0.0
    %51 = vmatpush1.msra.mxu0 %v27
    %52 = vmatprep.subr.mxu0 0.0
    %53 = vmatpush1.msra.mxu0 %v28
    %54 = vmatprep.subr.mxu0 0.0
    %55 = vmatpush1.msra.mxu0 %v29
    %56 = vmatprep.subr.mxu0 0.0
    %57 = vmatpush1.msra.mxu0 %v30
    %58 = vmatprep.subr.mxu0 0.0
    %59 = vmatpush1.msra.mxu0 0.0
    %60 = vmatprep.subr.mxu0 0.0
    %61 = vmatpush1.msra.mxu0 0.0
    %62 = vmatprep.subr.mxu0 0.0
    %63 = vmatpush1.msra.mxu0 0.0
    %64 = vmatprep.subr.mxu0 0.0
    %65 = vmatpush1.msra.mxu0 0.0
    %66 = vmatprep.subr.mxu0 0.0
    %67 = vmatpush1.msra.mxu0 0.0
    %68 = vmatprep.subr.mxu0 0.0
    %69 = vmatpush1.msra.mxu0 0.0
    %70 = vmatprep.subr.mxu0 0.0
    %71 = vmatpush1.msra.mxu0 0.0
    %72 = vmatprep.subr.mxu0 0.0
    %73 = vmatpush1.msra.mxu0 0.0
    %74 = vmatprep.subr.mxu0 0.0
    %75 = vmatpush1.msra.mxu0 0.0
    %76 = vmatprep.subr.mxu0 0.0
    %77 = vmatpush1.msra.mxu0 0.0
    %78 = vmatprep.subr.mxu0 0.0
    %79 = vmatpush1.msra.mxu0 0.0
    %80 = vmatprep.subr.mxu0 0.0
    %81 = vmatpush1.msra.mxu0 0.0
    %82 = vmatprep.subr.mxu0 0.0
    %83 = vmatpush1.msra.mxu0 0.0
    %84 = vmatprep.subr.mxu0 0.0
    %85 = vmatpush1.msra.mxu0 0.0
    %86 = vmatprep.subr.mxu0 0.0
    %87 = vmatpush1.msra.mxu0 0.0
    %88 = vmatprep.subr.mxu0 0.0
    %89 = vmatpush1.msra.mxu0 0.0
    %90 = vmatprep.subr.mxu0 0.0
    %91 = vmatpush1.msra.mxu0 0.0
    %92 = vmatprep.subr.mxu0 0.0
    %93 = vmatpush1.msra.mxu0 0.0
    %94 = vmatprep.subr.mxu0 0.0
    %95 = vmatpush1.msra.mxu0 0.0
    %96 = vmatprep.subr.mxu0 0.0
    %97 = vmatpush1.msra.mxu0 0.0
    %98 = vmatprep.subr.mxu0 0.0
    %99 = vmatpush1.msra.mxu0 0.0
    %100 = vmatprep.subr.mxu0 0.0
    %101 = vmatpush1.msra.mxu0 0.0
    %102 = vmatprep.subr.mxu0 0.0
    %103 = vmatpush1.msra.mxu0 0.0
    %104 = vmatprep.subr.mxu0 0.0
    %105 = vmatpush1.msra.mxu0 0.0
    %106 = vmatprep.subr.mxu0 0.0
    %107 = vmatpush1.msra.mxu0 0.0
    %108 = vmatprep.subr.mxu0 0.0
    %109 = vmatpush1.msra.mxu0 0.0
    %110 = vmatprep.subr.mxu0 0.0
    %111 = vmatpush1.msra.mxu0 0.0
    %112 = vmatprep.subr.mxu0 0.0
    %113 = vmatpush1.msra.mxu0 0.0
    %114 = vmatprep.mubr.f32.mxu0 0.0
    %115 = vmatmul.mubr.f32.gmra.mrb[0].mxu0 %v33
    %v116 = vpop.f32.mrb[0].mxu0
    %v117 = vadd.f32 0.0, %v116
    %v118 = vpop.f32.mrb[0].mxu0
    %119 = vmatprep.mubr.f32.mxu0 0.0
    %120 = vmatmul.mubr.f32.gmra.mrb[0].mxu0 %v36
    %v121 = vpop.f32.mrb[0].mxu0
    %v122 = vadd.f32 0.0, %v121
    %v123 = vpop.f32.mrb[0].mxu0
    %124 = vmatprep.mubr.f32.mxu0 0.0
    %125 = vmatmul.mubr.f32.gmra.mrb[0].mxu0 %v39
    %v126 = vpop.f32.mrb[0].mxu0
    %v127 = vadd.f32 0.0, %v126
    %v128 = vpop.f32.mrb[0].mxu0
    %129 = vmatprep.mubr.f32.mxu0 0.0
    %130 = vmatmul.mubr.f32.gmra.mrb[0].mxu0 %v42
    %v131 = vpop.f32.mrb[0].mxu0
    %v132 = vadd.f32 0.0, %v131
    %v133 = vpop.f32.mrb[0].mxu0
    %134 = vmatprep.mubr.f32.mxu0 0.0
    %135 = vmatmul.mubr.f32.gmra.mrb[0].mxu0 %v45
    %v136 = vpop.f32.mrb[0].mxu0
    %v137 = vadd.f32 0.0, %v136
    %v138 = vpop.f32.mrb[0].mxu0
    %139 = vmatprep.mubr.f32.mxu0 0.0
    %140 = vmatmul.mubr.f32.gmra.mrb[0].mxu0 %v48
    %v141 = vpop.f32.mrb[0].mxu0
    %v142 = vadd.f32 0.0, %v141
    %v143 = vpop.f32.mrb[0].mxu0
    %144 = vdwg.mxu0
    %v145 = vld [vmem:[%s2] sm:$0x1]
    %v147 = vlaneseq
    %v148 = vshrl.u32 %v147, 7
    %v149 = vsub.s32 0, %v148
    %v150 = vrot.slane %v145, %v149
    %v152 = vmul.f32 %v117, %v150
    %v153 = vmul.f32 %v122, %v150
    %v154 = vmul.f32 %v127, %v150
    %v155 = vmul.f32 %v132, %v150
    %v156 = vmul.f32 %v137, %v150
    %v157 = vmul.f32 %v142, %v150
    %v158 = vld [vmem:[%s3] sm:$0x1]
    %v160 = vlaneseq
    %v161 = vshrl.u32 %v160, 7
    %v162 = vsub.s32 0, %v161
    %v163 = vrot.slane %v158, %v162
    %v165 = vadd.f32 %v152, %v163
    %v166 = vadd.f32 %v153, %v163
    %v167 = vadd.f32 %v154, %v163
    %v168 = vadd.f32 %v155, %v163
    %v169 = vadd.f32 %v156, %v163
    %v170 = vadd.f32 %v157, %v163
    %v171 = vld [vmem:[%s4] sm:$0xff]
    %v172 = vld [vmem:[%s4 + $0x8] sm:$0xff]
    %v173 = vld [vmem:[%s4 + $0x10] sm:$0xff]
    %v174 = vld [vmem:[%s4 + $0x18] sm:$0xff]
    %v175 = vld [vmem:[%s4 + $0x20] sm:$0xff]
    %v176 = vld [vmem:[%s4 + $0x28] sm:$0xff]
    %v177 = vadd.f32 %v165, %v171
    %v178 = vadd.f32 %v166, %v172
    %v179 = vadd.f32 %v167, %v173
    %v180 = vadd.f32 %v168, %v174
    %v181 = vadd.f32 %v169, %v175
    %v182 = vadd.f32 %v170, %v176
    %v183 = vmax.f32 %v177, 0.0
    %v184 = vmax.f32 %v178, 0.0
    %v185 = vmax.f32 %v179, 0.0
    %v186 = vmax.f32 %v180, 0.0
    %v187 = vmax.f32 %v181, 0.0
    %v188 = vmax.f32 %v182, 0.0
    %189 = vst [vmem:[#allocation2] sm:$0xff] %v183
    %190 = vst [vmem:[#allocation2 + $0x8] sm:$0xff] %v184
    %191 = vst [vmem:[#allocation2 + $0x10] sm:$0xff] %v185
    %192 = vst [vmem:[#allocation2 + $0x18] sm:$0xff] %v186
    %193 = vst [vmem:[#allocation2 + $0x20] sm:$0xff] %v187
    %194 = vst [vmem:[#allocation2 + $0x28] sm:$0xff] %v188
    // Predicated region
    $region22: #{matmul_affine.1} parent=1 // pred_check
      _
    $region23: #{matmul_affine.1} parent=1 // pred_check_branch
      %196 = sbr.rel (0) target = $region25
    $region24: #{matmul_affine.1} parent=1 // pred_region
      %s198 = ssub.s32 768, 768
      %199 = vsyncadd [#allocation3], %s198
      %s200 = sshll.u32 [#allocation2], 4
      %s201 = int_to_ptr.vmem [resolvable:$true] %s200
      %206 = dma.vmem_to_hbm [thread:$0]  %s201, 768, %s5, [#allocation3], 128, 128, 8
    $region25: #{matmul_affine.1} parent=1 // pred_fallthru
      _
    // Predicated region
    $region26: #{matmul_affine.1} parent=1 // pred_check
      _
    $region27: #{matmul_affine.1} parent=1 // pred_check_branch
      %208 = sbr.rel (0) target = $region29
    $region28: #{matmul_affine.1} parent=1 // pred_region
      %209 = dma.done [#allocation3], 768
    $region29: #{matmul_affine.1} parent=1 // pred_fallthru
      _
    %210 = vsyncpa [#allocation3], 1

</llo_original>
